<compile_context>
chip_gen: v7x
topology: tpu7x:2x2x1
jax: 0.10.0
libtpu: 0.0.40
codegen_flags: <defaults>
</compile_context>

<pallas_src>
import functools

import jax
import jax.numpy as jnp
from jax.experimental import pallas as pl
from jax.experimental.pallas import tpu as pltpu

BN_EPS = 1e-5


def _res_mlp_kernel(x_ref, w1_ref, b1_ref, g_ref, beta_ref, w2_ref, b2_ref,
                    o_ref, acc_ref, *, add_residual, relu_last):
    h_idx = pl.program_id(0)

    @pl.when(h_idx == 0)
    def _():
        acc_ref[...] = jnp.zeros_like(acc_ref)

    # Linear 1 tile: [B, D] @ [D, TH] -> [B, TH]  (bf16 inputs, f32 accumulation)
    x_bf16 = x_ref[...].astype(jnp.bfloat16)
    h = jnp.dot(x_bf16, w1_ref[...], preferred_element_type=jnp.float32)
    h = h + b1_ref[...]

    # BatchNorm1d (training mode: batch stats, biased variance), one pass, f32.
    inv_b = 1.0 / h.shape[0]
    mean = jnp.sum(h, axis=0, keepdims=True) * inv_b
    sq_mean = jnp.sum(h * h, axis=0, keepdims=True) * inv_b
    var = jnp.maximum(sq_mean - mean * mean, 0.0)
    h = (h - mean) * jax.lax.rsqrt(var + BN_EPS)
    h = h * g_ref[...] + beta_ref[...]

    # ReLU
    h = jnp.maximum(h, 0.0)

    # Linear 2 tile: [B, TH] @ [TH, D] -> accumulate into f32 scratch.
    acc_ref[...] += jnp.dot(h.astype(jnp.bfloat16), w2_ref[...],
                            preferred_element_type=jnp.float32)

    @pl.when(h_idx == pl.num_programs(0) - 1)
    def _():
        out = acc_ref[...] + b2_ref[...]
        x_res = x_ref[...].astype(jnp.float32)   # residual in f32
        if add_residual:
            out = out + x_res
        else:
            out = out - x_res
        if relu_last:
            out = jnp.maximum(out, 0.0)
        o_ref[...] = out.astype(o_ref.dtype)


def _pick_block_h(H):
    """Largest 128-multiple tile (<=512) that divides H; else take full H."""
    for th in (512, 256, 128):
        if H % th == 0:
            return th
    return H


def res_mlp_d(x, params, *, forward=True, relu_last=False, block_h=None):
    """x: [B, D] float32. params: w1[D,H], b1[1,H], gamma[1,H], beta[1,H], w2[H,D], b2[1,D]."""
    B, D = x.shape
    H = params["w1"].shape[1]
    assert params["w2"].shape == (H, D), "residual requires projection_size == dim"

    if block_h is None:
        block_h = _pick_block_h(H)
    assert H % block_h == 0
    n_h = H // block_h

    # bf16 weights: halves weight HBM traffic, bf16-native MXU on v5e/v6e/v7x.
    w1 = params["w1"].astype(jnp.bfloat16)
    w2 = params["w2"].astype(jnp.bfloat16)
    b1 = params["b1"].astype(jnp.float32)
    gamma = params["gamma"].astype(jnp.float32)
    beta = params["beta"].astype(jnp.float32)
    b2 = params["b2"].astype(jnp.float32)

    kernel = functools.partial(
        _res_mlp_kernel,
        add_residual=bool(forward),
        relu_last=bool(relu_last),
    )

    # VMEM budget estimate (double-buffered bf16 weight tiles dominate), with
    # headroom, clamped to <= 64 MiB so the limit is valid on v7x as well.
    est_bytes = (
        2 * 2 * (D * block_h + block_h * D) * 2   # w1/w2 tiles, 2-deep, bf16
        + 2 * B * D * 4 * 2                       # x + out blocks
        + B * D * 4                               # f32 accumulator scratch
        + 4 * B * block_h * 4                     # h temporaries
        + (3 * block_h + D) * 4 * 2               # bias / gamma / beta tiles
    )
    vmem_limit = int(min(max(2 * est_bytes, 32 << 20), 64 << 20))

    flops = 4 * B * H * D + 12 * B * H            # two matmuls + BN/ReLU elementwise
    bytes_accessed = 2 * D * H * 2 + 2 * B * D * 4 + (3 * H + D) * 4

    grid_spec = pltpu.PrefetchScalarGridSpec(
        num_scalar_prefetch=0,
        grid=(n_h,),
        in_specs=[
            pl.BlockSpec((B, D), lambda h: (0, 0)),           # x (resident)
            pl.BlockSpec((D, block_h), lambda h: (0, h)),     # w1 tile
            pl.BlockSpec((1, block_h), lambda h: (0, h)),     # b1 tile
            pl.BlockSpec((1, block_h), lambda h: (0, h)),     # gamma tile
            pl.BlockSpec((1, block_h), lambda h: (0, h)),     # beta tile
            pl.BlockSpec((block_h, D), lambda h: (h, 0)),     # w2 tile
            pl.BlockSpec((1, D), lambda h: (0, 0)),           # b2 (resident)
        ],
        out_specs=pl.BlockSpec((B, D), lambda h: (0, 0)),     # out (resident)
        scratch_shapes=[pltpu.VMEM((B, D), jnp.float32)],     # f32 accumulator
    )

    return pl.pallas_call(
        kernel,
        out_shape=jax.ShapeDtypeStruct((B, D), x.dtype),
        grid_spec=grid_spec,
        compiler_params=pltpu.CompilerParams(
            dimension_semantics=("arbitrary",),               # H is a reduction axis
            vmem_limit_bytes=vmem_limit,
        ),
        cost_estimate=pl.CostEstimate(
            flops=flops, transcendentals=H, bytes_accessed=bytes_accessed),
    )(x, w1, b1, gamma, beta, w2, b2)


def init_params(key, dim, hidden):
    """Deterministic init mimicking PyTorch Linear (uniform +-1/sqrt(fan_in))
    and BatchNorm1d (gamma=1, beta=0)."""
    k1, k2, k3, k4 = jax.random.split(key, 4)
    lim1 = 1.0 / (dim ** 0.5)
    lim2 = 1.0 / (hidden ** 0.5)
    return {
        "w1": jax.random.uniform(k1, (dim, hidden), jnp.float32, -lim1, lim1),
        "b1": jax.random.uniform(k2, (1, hidden), jnp.float32, -lim1, lim1),
        "gamma": jnp.ones((1, hidden), jnp.float32),
        "beta": jnp.zeros((1, hidden), jnp.float32),
        "w2": jax.random.uniform(k3, (hidden, dim), jnp.float32, -lim2, lim2),
        "b2": jax.random.uniform(k4, (1, dim), jnp.float32, -lim2, lim2),
    }


def res_mlp_d_ref_f32(x, params, *, forward=True, relu_last=False):
    """Pure-f32 reference with the exact PyTorch-module semantics."""
    h = x @ params["w1"] + params["b1"]
    mean = jnp.mean(h, axis=0, keepdims=True)
    var = jnp.mean((h - mean) ** 2, axis=0, keepdims=True)
    h = (h - mean) / jnp.sqrt(var + BN_EPS) * params["gamma"] + params["beta"]
    h = jnp.maximum(h, 0.0)
    out = h @ params["w2"] + params["b2"]
    out = out + x if forward else out - x
    if relu_last:
        out = jnp.maximum(out, 0.0)
    return out


def res_mlp_d_ref_kernel_numerics(x, params, *, forward=True, relu_last=False):
    """Pure-JAX reference mirroring the kernel numerics (bf16 matmul inputs,
    f32 accumulation, f32 single-pass BN, f32 residual)."""
    w1 = params["w1"].astype(jnp.bfloat16)
    w2 = params["w2"].astype(jnp.bfloat16)
    h = jnp.dot(x.astype(jnp.bfloat16), w1,
                preferred_element_type=jnp.float32) + params["b1"]
    inv_b = 1.0 / h.shape[0]
    mean = jnp.sum(h, axis=0, keepdims=True) * inv_b
    var = jnp.maximum(jnp.sum(h * h, axis=0, keepdims=True) * inv_b - mean * mean, 0.0)
    h = (h - mean) * jax.lax.rsqrt(var + BN_EPS) * params["gamma"] + params["beta"]
    h = jnp.maximum(h, 0.0)
    out = jnp.dot(h.astype(jnp.bfloat16), w2,
                  preferred_element_type=jnp.float32) + params["b2"]
    out = out + x if forward else out - x
    if relu_last:
        out = jnp.maximum(out, 0.0)
    return out


if __name__ == "__main__":
    # Small shapes: batch=8 (fills the 8 sublanes), dim=projection_size=128, hidden=256.
    # block_h=128 -> 2-step H grid, exercising the streamed/accumulated path.
    B, D, H = 8, 128, 256
    key = jax.random.PRNGKey(0)
    kx, kp = jax.random.split(key)
    x = jax.random.normal(kx, (B, D), jnp.float32)
    params = init_params(kp, D, H)

    out = res_mlp_d(x, params, forward=True, block_h=128)
    out = jax.block_until_ready(out)
    assert out.shape == (B, D)

    # Tight check against a reference with identical numerics.
    ref_kn = res_mlp_d_ref_kernel_numerics(x, params, forward=True)
    assert jnp.allclose(out, ref_kn, atol=2e-3, rtol=2e-3), "mismatch vs bf16-numerics reference"

    # Loose check against the pure-f32 PyTorch-semantics reference (bf16 matmul error).
    ref_f32 = res_mlp_d_ref_f32(x, params, forward=True)
    assert jnp.allclose(out, ref_f32, atol=3e-2, rtol=3e-2), "mismatch vs f32 reference"

    # Also check the forward=False (subtract residual) path.
    out_b = jax.block_until_ready(res_mlp_d(x, params, forward=False, block_h=128))
    ref_b = res_mlp_d_ref_kernel_numerics(x, params, forward=False)
    assert jnp.allclose(out_b, ref_b, atol=2e-3, rtol=2e-3), "mismatch on forward=False path"

    print("KERNEL_OK")
</pallas_src>

<mosaic_0001>
module attributes {stable_mosaic.version = 11 : i64} {
  func.func @_res_mlp_kernel(%arg0: i32, %arg1: memref<8x128xf32, #tpu.memory_space<vmem>>, %arg2: memref<128x128xbf16, #tpu.memory_space<vmem>>, %arg3: memref<1x128xf32, #tpu.memory_space<vmem>>, %arg4: memref<1x128xf32, #tpu.memory_space<vmem>>, %arg5: memref<1x128xf32, #tpu.memory_space<vmem>>, %arg6: memref<128x128xbf16, #tpu.memory_space<vmem>>, %arg7: memref<1x128xf32, #tpu.memory_space<vmem>>, %arg8: memref<8x128xf32, #tpu.memory_space<vmem>>, %arg9: memref<8x128xf32, #tpu.memory_space<vmem>>) attributes {dimension_semantics = [#tpu.dimension_semantics<arbitrary>], iteration_bounds = array<i64: 2>, scalar_prefetch = 0 : i64, scratch_operands = 1 : i64, tpu.core_type = #tpu.core_type<tc>, window_params = [{pipeline_mode = #tpu.pipeline_mode<synchronous>, transform_indices = @transform_0, window_bounds = array<i64: 8, 128>}, {transform_indices = @transform_1, window_bounds = array<i64: 128, 128>}, {transform_indices = @transform_2, window_bounds = array<i64: 1, 128>}, {transform_indices = @transform_3, window_bounds = array<i64: 1, 128>}, {transform_indices = @transform_4, window_bounds = array<i64: 1, 128>}, {transform_indices = @transform_5, window_bounds = array<i64: 128, 128>}, {pipeline_mode = #tpu.pipeline_mode<synchronous>, transform_indices = @transform_6, window_bounds = array<i64: 1, 128>}, {pipeline_mode = #tpu.pipeline_mode<synchronous>, transform_indices = @transform_7, window_bounds = array<i64: 8, 128>}]} {
    %c0_i32 = arith.constant 0 : i32
    %0 = arith.cmpi eq, %arg0, %c0_i32 : i32
    %1 = arith.extui %0 : i1 to i32
    %c0_i32_0 = arith.constant 0 : i32
    %2 = arith.cmpi ne, %1, %c0_i32_0 : i32
    scf.if %2 {
      %cst_25 = arith.constant 0.000000e+00 : f32
      %47 = vector.broadcast %cst_25 : f32 to vector<8x128xf32>
      %c0_26 = arith.constant 0 : index
      %c0_27 = arith.constant 0 : index
      %48 = vector.load %arg9[%c0_26, %c0_27] : memref<8x128xf32, #tpu.memory_space<vmem>>, vector<8x128xf32>
      tpu.vector_store %arg9[%c0_26, %c0_27], %47 {strides = array<i32>} : memref<8x128xf32, #tpu.memory_space<vmem>>, vector<8x128xf32>,
    } else {
    }
    %c0 = arith.constant 0 : index
    %c0_1 = arith.constant 0 : index
    %3 = vector.load %arg1[%c0, %c0_1] : memref<8x128xf32, #tpu.memory_space<vmem>>, vector<8x128xf32>
    %4 = arith.truncf %3 : vector<8x128xf32> to vector<8x128xbf16>
    %c0_2 = arith.constant 0 : index
    %c0_3 = arith.constant 0 : index
    %5 = vector.load %arg2[%c0_2, %c0_3] : memref<128x128xbf16, #tpu.memory_space<vmem>>, vector<128x128xbf16>
    %cst = arith.constant dense<0.000000e+00> : vector<8x128xf32>
    %6 = tpu.matmul %4, %5, %cst {dimension_numbers = #tpu.dot_dimension_numbers<[1], [0], [0], [1], [0, 0, 1, 1], [], []>} : vector<8x128xbf16>, vector<128x128xbf16>, vector<8x128xf32> -> vector<8x128xf32>
    %c0_4 = arith.constant 0 : index
    %c0_5 = arith.constant 0 : index
    %7 = vector.load %arg3[%c0_4, %c0_5] : memref<1x128xf32, #tpu.memory_space<vmem>>, vector<1x128xf32>
    %8 = vector.broadcast %7 : vector<1x128xf32> to vector<8x128xf32>
    %9 = arith.addf %6, %8 : vector<8x128xf32>
    %cst_6 = arith.constant dense<0.000000e+00> : vector<128xf32>
    %10 = vector.multi_reduction <add>, %9, %cst_6 [0] : vector<8x128xf32> to vector<128xf32>
    %11 = vector.shape_cast %10 : vector<128xf32> to vector<1x128xf32>
    %cst_7 = arith.constant 1.250000e-01 : f32
    %12 = vector.broadcast %cst_7 : f32 to vector<1x128xf32>
    %13 = arith.mulf %11, %12 : vector<1x128xf32>
    %14 = arith.mulf %9, %9 : vector<8x128xf32>
    %cst_8 = arith.constant dense<0.000000e+00> : vector<128xf32>
    %15 = vector.multi_reduction <add>, %14, %cst_8 [0] : vector<8x128xf32> to vector<128xf32>
    %16 = vector.shape_cast %15 : vector<128xf32> to vector<1x128xf32>
    %cst_9 = arith.constant 1.250000e-01 : f32
    %17 = vector.broadcast %cst_9 : f32 to vector<1x128xf32>
    %18 = arith.mulf %16, %17 : vector<1x128xf32>
    %19 = arith.mulf %13, %13 : vector<1x128xf32>
    %20 = arith.subf %18, %19 : vector<1x128xf32>
    %cst_10 = arith.constant 0.000000e+00 : f32
    %21 = vector.broadcast %cst_10 : f32 to vector<1x128xf32>
    %22 = arith.maximumf %20, %21 : vector<1x128xf32>
    %23 = vector.broadcast %13 : vector<1x128xf32> to vector<8x128xf32>
    %24 = arith.subf %9, %23 : vector<8x128xf32>
    %cst_11 = arith.constant 9.99999974E-6 : f32
    %25 = vector.broadcast %cst_11 : f32 to vector<1x128xf32>
    %26 = arith.addf %22, %25 : vector<1x128xf32>
    %27 = math.rsqrt %26 : vector<1x128xf32>
    %28 = vector.broadcast %27 : vector<1x128xf32> to vector<8x128xf32>
    %29 = arith.mulf %24, %28 : vector<8x128xf32>
    %c0_12 = arith.constant 0 : index
    %c0_13 = arith.constant 0 : index
    %30 = vector.load %arg4[%c0_12, %c0_13] : memref<1x128xf32, #tpu.memory_space<vmem>>, vector<1x128xf32>
    %31 = vector.broadcast %30 : vector<1x128xf32> to vector<8x128xf32>
    %32 = arith.mulf %29, %31 : vector<8x128xf32>
    %c0_14 = arith.constant 0 : index
    %c0_15 = arith.constant 0 : index
    %33 = vector.load %arg5[%c0_14, %c0_15] : memref<1x128xf32, #tpu.memory_space<vmem>>, vector<1x128xf32>
    %34 = vector.broadcast %33 : vector<1x128xf32> to vector<8x128xf32>
    %35 = arith.addf %32, %34 : vector<8x128xf32>
    %cst_16 = arith.constant 0.000000e+00 : f32
    %36 = vector.broadcast %cst_16 : f32 to vector<8x128xf32>
    %37 = arith.maximumf %35, %36 : vector<8x128xf32>
    %c0_17 = arith.constant 0 : index
    %c0_18 = arith.constant 0 : index
    %38 = vector.load %arg9[%c0_17, %c0_18] : memref<8x128xf32, #tpu.memory_space<vmem>>, vector<8x128xf32>
    %39 = arith.truncf %37 : vector<8x128xf32> to vector<8x128xbf16>
    %c0_19 = arith.constant 0 : index
    %c0_20 = arith.constant 0 : index
    %40 = vector.load %arg6[%c0_19, %c0_20] : memref<128x128xbf16, #tpu.memory_space<vmem>>, vector<128x128xbf16>
    %cst_21 = arith.constant dense<0.000000e+00> : vector<8x128xf32>
    %41 = tpu.matmul %39, %40, %cst_21 {dimension_numbers = #tpu.dot_dimension_numbers<[1], [0], [0], [1], [0, 0, 1, 1], [], []>} : vector<8x128xbf16>, vector<128x128xbf16>, vector<8x128xf32> -> vector<8x128xf32>
    %42 = arith.addf %38, %41 : vector<8x128xf32>
    %c0_22 = arith.constant 0 : index
    %c0_23 = arith.constant 0 : index
    %43 = vector.load %arg9[%c0_22, %c0_23] : memref<8x128xf32, #tpu.memory_space<vmem>>, vector<8x128xf32>
    tpu.vector_store %arg9[%c0_22, %c0_23], %42 {strides = array<i32>} : memref<8x128xf32, #tpu.memory_space<vmem>>, vector<8x128xf32>,
    %c1_i32 = arith.constant 1 : i32
    %44 = arith.cmpi eq, %arg0, %c1_i32 : i32
    %45 = arith.extui %44 : i1 to i32
    %c0_i32_24 = arith.constant 0 : i32
    %46 = arith.cmpi ne, %45, %c0_i32_24 : i32
    scf.if %46 {
      %c0_25 = arith.constant 0 : index
      %c0_26 = arith.constant 0 : index
      %47 = vector.load %arg9[%c0_25, %c0_26] : memref<8x128xf32, #tpu.memory_space<vmem>>, vector<8x128xf32>
      %c0_27 = arith.constant 0 : index
      %c0_28 = arith.constant 0 : index
      %48 = vector.load %arg7[%c0_27, %c0_28] : memref<1x128xf32, #tpu.memory_space<vmem>>, vector<1x128xf32>
      %49 = vector.broadcast %48 : vector<1x128xf32> to vector<8x128xf32>
      %50 = arith.addf %47, %49 : vector<8x128xf32>
      %c0_29 = arith.constant 0 : index
      %c0_30 = arith.constant 0 : index
      %51 = vector.load %arg1[%c0_29, %c0_30] : memref<8x128xf32, #tpu.memory_space<vmem>>, vector<8x128xf32>
      %52 = arith.addf %50, %51 : vector<8x128xf32>
      %c0_31 = arith.constant 0 : index
      %c0_32 = arith.constant 0 : index
      %53 = vector.load %arg8[%c0_31, %c0_32] : memref<8x128xf32, #tpu.memory_space<vmem>>, vector<8x128xf32>
      tpu.vector_store %arg8[%c0_31, %c0_32], %52 {strides = array<i32>} : memref<8x128xf32, #tpu.memory_space<vmem>>, vector<8x128xf32>,
    } else {
    }
    return
  }
  func.func @transform_0(%arg0: i32) -> (i32, i32) {
    %c0_i32 = arith.constant 0 : i32
    %c0_i32_0 = arith.constant 0 : i32
    %c0_i32_1 = arith.constant 0 : i32
    return %c0_i32, %c0_i32_0 : i32, i32
  }
  func.func @transform_1(%arg0: i32) -> (i32, i32) {
    %c0_i32 = arith.constant 0 : i32
    %c0_i32_0 = arith.constant 0 : i32
    return %c0_i32, %arg0 : i32, i32
  }
  func.func @transform_2(%arg0: i32) -> (i32, i32) {
    %c0_i32 = arith.constant 0 : i32
    %c0_i32_0 = arith.constant 0 : i32
    return %c0_i32, %arg0 : i32, i32
  }
  func.func @transform_3(%arg0: i32) -> (i32, i32) {
    %c0_i32 = arith.constant 0 : i32
    %c0_i32_0 = arith.constant 0 : i32
    return %c0_i32, %arg0 : i32, i32
  }
  func.func @transform_4(%arg0: i32) -> (i32, i32) {
    %c0_i32 = arith.constant 0 : i32
    %c0_i32_0 = arith.constant 0 : i32
    return %c0_i32, %arg0 : i32, i32
  }
  func.func @transform_5(%arg0: i32) -> (i32, i32) {
    %c0_i32 = arith.constant 0 : i32
    %c0_i32_0 = arith.constant 0 : i32
    return %arg0, %c0_i32 : i32, i32
  }
  func.func @transform_6(%arg0: i32) -> (i32, i32) {
    %c0_i32 = arith.constant 0 : i32
    %c0_i32_0 = arith.constant 0 : i32
    %c0_i32_1 = arith.constant 0 : i32
    return %c0_i32, %c0_i32_0 : i32, i32
  }
  func.func @transform_7(%arg0: i32) -> (i32, i32) {
    %c0_i32 = arith.constant 0 : i32
    %c0_i32_0 = arith.constant 0 : i32
    %c0_i32_1 = arith.constant 0 : i32
    return %c0_i32, %c0_i32_0 : i32, i32
  }
}

</mosaic_0001>

<llo_original>
// kernel: tpu_custom_call.1
$region0: #{tpu_custom_call.1}
  #allocation0 [shape = 'u32[]', space=smem, size = 0x4, offset = 0x4, fixed_abs, tag = 'smem constant byte address 0x4 - core index']
  #allocation1 [shape = 'u32[144,128]{1,0:T(1,128)}', space=vmem, size = 0x12000, scoped, tag = 'internal scratch']
  #allocation2 [shape = 'f32[8,128]{1,0:T(8,128)}', space=vmem, size = 0x1000, scoped, tag = 'scratch operand']
  %s0 = inlined_call_operand.hbm [shape: f32[8,128], index: 0, kind: input, shape index: {}]
  %s1 = inlined_call_operand.hbm [shape: bf16[128,256], index: 1, kind: input, shape index: {}]
  %s2 = inlined_call_operand.vmem [shape: f32[1,256], index: 2, kind: input, shape index: {}]
  %s3 = inlined_call_operand.vmem [shape: f32[1,256], index: 3, kind: input, shape index: {}]
  %s4 = inlined_call_operand.vmem [shape: f32[1,256], index: 4, kind: input, shape index: {}]
  %s5 = inlined_call_operand.hbm [shape: bf16[256,128], index: 5, kind: input, shape index: {}]
  %s6 = inlined_call_operand.vmem [shape: f32[1,128], index: 6, kind: input, shape index: {}]
  %s7 = inlined_call_operand.hbm [shape: f32[8,128], index: 7, kind: output, shape index: {}]
  %s8 = sld [smem:[#allocation0]]
  $region81: #{tpu_custom_call.1} parent=0
    _
  %s10 = ssub.s32 1, %s8
  %s11 = scalar_select 0, %s10, %s8
  $region1: #{tpu_custom_call.1} parent=0
    #allocation3 [shape = 'u8[4096]{0}', space=vmem, size = 0x1000, scoped, tag = 'input window, operand 0, single buffered']
    #allocation4 [shape = 's32[2]{0}', space=sflag, size = 0x8, scoped, tag = 'scoped memory for tpu_custom_call.1']
    #allocation5 [shape = 's32[2]{0}', space=sflag, size = 0x8, scoped, tag = 'scoped memory for tpu_custom_call.1']
    #allocation6 [shape = 'u8[65536]{0}', space=vmem, size = 0x10000, scoped, tag = 'input window, operand 1']
    #allocation7 [shape = 's32[2]{0}', space=sflag, size = 0x8, scoped, tag = 'scoped memory for tpu_custom_call.1']
    #allocation8 [shape = 'u8[65536]{0}', space=vmem, size = 0x10000, scoped, tag = 'input window, operand 5']
    #allocation9 [shape = 'u8[4096]{0}', space=vmem, size = 0x1000, scoped, tag = 'output window, operand 0, single buffered']
    %12 = vsyncpa [#allocation4], 0
    %13 = vsyncpa [#allocation7], 0
    %s14 = scalar_lea.sflag [#allocation7], 1
    %15 = vsyncpa %s14, 0
    %16 = vsyncpa [#allocation5], 0
    loop: start=0, step=1, limit=4
    $region2: #{tpu_custom_call.1} parent=1 // loop_pre_header
      _
    $region3: #{tpu_custom_call.1} parent=1 // loop_header
      %s18 = sphi 0, %s22
      %p19 = scmp.ge.s32.totalorder %s18, 4
      %s26 = sphi 0, %s26
      %s28 = sphi 0, %s26
      %s29 = sphi 0, %s28
      %s43 = sphi 0, %s29
      %s49 = sphi 0, %s51
      %s52 = sphi 0, %s49
      %s53 = sphi 0, %s52
      %s69 = sphi 0, %s53
      %s75 = sphi 0, %s77
      %s78 = sphi 0, %s75
      %s79 = sphi 0, %s78
      %s95 = sphi 0, %s79
      %s101 = sphi 0, %s103
      %s104 = sphi 0, %s101
      %s105 = sphi 0, %s104
      %s121 = sphi 0, %s105
      %s127 = sphi 0, %s129
      %s130 = sphi 0, %s127
      %s131 = sphi 0, %s130
      %s147 = sphi 0, %s131
      %s153 = sphi 0, %s155
      %s156 = sphi 0, %s153
      %s157 = sphi 0, %s156
      %s173 = sphi 0, %s157
      %s177 = sphi 0, %s177
      %s179 = sphi 0, %s177
      %s180 = sphi 0, %s179
      %s194 = sphi 0, %s180
      %s198 = sphi 0, %s198
      %s200 = sphi 0, %s198
      %s201 = sphi 0, %s200
      %s215 = sphi 0, %s201
    $region4: #{tpu_custom_call.1} parent=1 // loop_header_branch
      %21 = sbr.rel (%p19) target = $region8
    $region5: #{tpu_custom_call.1} parent=1 // loop_body
      %s23 = ssub.s32 %s18, 1
      %s24 = ssub.s32 %s18, 2
      %s25 = sadd.s32 %s18, 1
      %s27 = sadd.s32 %s26, 1
      %p30 = scmp.eq.s32.totalorder %s18, 1
      %p31 = scmp.ne.s32.totalorder %s26, %s28
      %p32 = scmp.eq.s32.totalorder %s18, 0
      %p33 = por %p31, %p32
      %p34 = scmp.ne.s32.totalorder %s26, %s28
      %p35 = scmp.eq.s32.totalorder %s23, 1
      %p36 = por %p34, %p35
      %p37 = scmp.ne.s32.totalorder %s28, %s29
      %p38 = scmp.eq.s32.totalorder %s23, 0
      %p39 = por %p37, %p38
      %p40 = scmp.ne.s32.totalorder %s28, %s29
      %p41 = scmp.eq.s32.totalorder %s24, 1
      %p42 = por %p40, %p41
      %p44 = scmp.ne.s32.totalorder %s29, %s43
      %p45 = scmp.eq.s32.totalorder %s24, 0
      %p46 = por %p44, %p45
      %s47 = ssub.s32 %s18, %s25
      %p48 = scmp.eq.s32.totalorder %s47, 0
      %s50 = sadd.s32 %s49, 1
      %s51 = scalar_select %p48, %s49, %s50
      %p54 = pneg %p48
      %p55 = scmp.eq.s32.totalorder %s18, 1
      %p56 = por %p54, %p55
      %p57 = scmp.ne.s32.totalorder %s49, %s52
      %p58 = scmp.eq.s32.totalorder %s18, 0
      %p59 = por %p57, %p58
      %p60 = scmp.ne.s32.totalorder %s49, %s52
      %p61 = scmp.eq.s32.totalorder %s23, 1
      %p62 = por %p60, %p61
      %p63 = scmp.ne.s32.totalorder %s52, %s53
      %p64 = scmp.eq.s32.totalorder %s23, 0
      %p65 = por %p63, %p64
      %p66 = scmp.ne.s32.totalorder %s52, %s53
      %p67 = scmp.eq.s32.totalorder %s24, 1
      %p68 = por %p66, %p67
      %p70 = scmp.ne.s32.totalorder %s53, %s69
      %p71 = scmp.eq.s32.totalorder %s24, 0
      %p72 = por %p70, %p71
      %s73 = ssub.s32 %s18, %s25
      %p74 = scmp.eq.s32.totalorder %s73, 0
      %s76 = sadd.s32 %s75, 1
      %s77 = scalar_select %p74, %s75, %s76
      %p80 = pneg %p74
      %p81 = scmp.eq.s32.totalorder %s18, 1
      %p82 = por %p80, %p81
      %p83 = scmp.ne.s32.totalorder %s75, %s78
      %p84 = scmp.eq.s32.totalorder %s18, 0
      %p85 = por %p83, %p84
      %p86 = scmp.ne.s32.totalorder %s75, %s78
      %p87 = scmp.eq.s32.totalorder %s23, 1
      %p88 = por %p86, %p87
      %p89 = scmp.ne.s32.totalorder %s78, %s79
      %p90 = scmp.eq.s32.totalorder %s23, 0
      %p91 = por %p89, %p90
      %p92 = scmp.ne.s32.totalorder %s78, %s79
      %p93 = scmp.eq.s32.totalorder %s24, 1
      %p94 = por %p92, %p93
      %p96 = scmp.ne.s32.totalorder %s79, %s95
      %p97 = scmp.eq.s32.totalorder %s24, 0
      %p98 = por %p96, %p97
      %s99 = ssub.s32 %s18, %s25
      %p100 = scmp.eq.s32.totalorder %s99, 0
      %s102 = sadd.s32 %s101, 1
      %s103 = scalar_select %p100, %s101, %s102
      %p106 = pneg %p100
      %p107 = scmp.eq.s32.totalorder %s18, 1
      %p108 = por %p106, %p107
      %p109 = scmp.ne.s32.totalorder %s101, %s104
      %p110 = scmp.eq.s32.totalorder %s18, 0
      %p111 = por %p109, %p110
      %p112 = scmp.ne.s32.totalorder %s101, %s104
      %p113 = scmp.eq.s32.totalorder %s23, 1
      %p114 = por %p112, %p113
      %p115 = scmp.ne.s32.totalorder %s104, %s105
      %p116 = scmp.eq.s32.totalorder %s23, 0
      %p117 = por %p115, %p116
      %p118 = scmp.ne.s32.totalorder %s104, %s105
      %p119 = scmp.eq.s32.totalorder %s24, 1
      %p120 = por %p118, %p119
      %p122 = scmp.ne.s32.totalorder %s105, %s121
      %p123 = scmp.eq.s32.totalorder %s24, 0
      %p124 = por %p122, %p123
      %s125 = ssub.s32 %s18, %s25
      %p126 = scmp.eq.s32.totalorder %s125, 0
      %s128 = sadd.s32 %s127, 1
      %s129 = scalar_select %p126, %s127, %s128
      %p132 = pneg %p126
      %p133 = scmp.eq.s32.totalorder %s18, 1
      %p134 = por %p132, %p133
      %p135 = scmp.ne.s32.totalorder %s127, %s130
      %p136 = scmp.eq.s32.totalorder %s18, 0
      %p137 = por %p135, %p136
      %p138 = scmp.ne.s32.totalorder %s127, %s130
      %p139 = scmp.eq.s32.totalorder %s23, 1
      %p140 = por %p138, %p139
      %p141 = scmp.ne.s32.totalorder %s130, %s131
      %p142 = scmp.eq.s32.totalorder %s23, 0
      %p143 = por %p141, %p142
      %p144 = scmp.ne.s32.totalorder %s130, %s131
      %p145 = scmp.eq.s32.totalorder %s24, 1
      %p146 = por %p144, %p145
      %p148 = scmp.ne.s32.totalorder %s131, %s147
      %p149 = scmp.eq.s32.totalorder %s24, 0
      %p150 = por %p148, %p149
      %s151 = ssub.s32 %s18, %s25
      %p152 = scmp.eq.s32.totalorder %s151, 0
      %s154 = sadd.s32 %s153, 1
      %s155 = scalar_select %p152, %s153, %s154
      %p158 = pneg %p152
      %p159 = scmp.eq.s32.totalorder %s18, 1
      %p160 = por %p158, %p159
      %p161 = scmp.ne.s32.totalorder %s153, %s156
      %p162 = scmp.eq.s32.totalorder %s18, 0
      %p163 = por %p161, %p162
      %p164 = scmp.ne.s32.totalorder %s153, %s156
      %p165 = scmp.eq.s32.totalorder %s23, 1
      %p166 = por %p164, %p165
      %p167 = scmp.ne.s32.totalorder %s156, %s157
      %p168 = scmp.eq.s32.totalorder %s23, 0
      %p169 = por %p167, %p168
      %p170 = scmp.ne.s32.totalorder %s156, %s157
      %p171 = scmp.eq.s32.totalorder %s24, 1
      %p172 = por %p170, %p171
      %p174 = scmp.ne.s32.totalorder %s157, %s173
      %p175 = scmp.eq.s32.totalorder %s24, 0
      %p176 = por %p174, %p175
      %s178 = sadd.s32 %s177, 1
      %p181 = scmp.eq.s32.totalorder %s18, 1
      %p182 = scmp.ne.s32.totalorder %s177, %s179
      %p183 = scmp.eq.s32.totalorder %s18, 0
      %p184 = por %p182, %p183
      %p185 = scmp.ne.s32.totalorder %s177, %s179
      %p186 = scmp.eq.s32.totalorder %s23, 1
      %p187 = por %p185, %p186
      %p188 = scmp.ne.s32.totalorder %s179, %s180
      %p189 = scmp.eq.s32.totalorder %s23, 0
      %p190 = por %p188, %p189
      %p191 = scmp.ne.s32.totalorder %s179, %s180
      %p192 = scmp.eq.s32.totalorder %s24, 1
      %p193 = por %p191, %p192
      %p195 = scmp.ne.s32.totalorder %s180, %s194
      %p196 = scmp.eq.s32.totalorder %s24, 0
      %p197 = por %p195, %p196
      %s199 = sadd.s32 %s198, 1
      %p202 = scmp.eq.s32.totalorder %s18, 1
      %p203 = scmp.ne.s32.totalorder %s198, %s200
      %p204 = scmp.eq.s32.totalorder %s18, 0
      %p205 = por %p203, %p204
      %p206 = scmp.ne.s32.totalorder %s198, %s200
      %p207 = scmp.eq.s32.totalorder %s23, 1
      %p208 = por %p206, %p207
      %p209 = scmp.ne.s32.totalorder %s200, %s201
      %p210 = scmp.eq.s32.totalorder %s23, 0
      %p211 = por %p209, %p210
      %p212 = scmp.ne.s32.totalorder %s200, %s201
      %p213 = scmp.eq.s32.totalorder %s24, 1
      %p214 = por %p212, %p213
      %p216 = scmp.ne.s32.totalorder %s201, %s215
      %p217 = scmp.eq.s32.totalorder %s24, 0
      %p218 = por %p216, %p217
      %p219 = scmp.le.s32.totalorder 1, %s18
      %p220 = scmp.lt.s32.totalorder %s18, 3
      %p221 = pnand %p219, %p220
      %p222 = pneg %p221
      // Predicated region
      $region9: #{tpu_custom_call.1} parent=5 // pred_check
        _
      $region10: #{tpu_custom_call.1} parent=5 // pred_check_branch
        %224 = sbr.rel (%p221) target = $region12
      $region11: #{tpu_custom_call.1} parent=5 // pred_region
        %s225 = ssub.s32 %s18, 1
        // Predicated region
        $region13: #{tpu_custom_call.1} parent=11 // pred_check
          %p226 = pneg %p39
        $region14: #{tpu_custom_call.1} parent=11 // pred_check_branch
          %228 = sbr.rel (%p226) target = $region16
        $region15: #{tpu_custom_call.1} parent=11 // pred_region
          %s230 = ssub.s32 128, 128
          %231 = vsyncadd [#allocation4], %s230
          %s233 = sshll.u32 [#allocation3], 4
          %s234 = int_to_ptr.vmem [resolvable:$true] %s233
          %236 = dma.hbm_to_vmem [thread:$0]  %s0, 128, %s234, [#allocation4]
        $region16: #{tpu_custom_call.1} parent=11 // pred_fallthru
          _
        // Predicated region
        $region17: #{tpu_custom_call.1} parent=11 // pred_check
          %p237 = pneg %p190
        $region18: #{tpu_custom_call.1} parent=11 // pred_check_branch
          %239 = sbr.rel (%p237) target = $region20
        $region19: #{tpu_custom_call.1} parent=11 // pred_region
          _
        $region20: #{tpu_custom_call.1} parent=11 // pred_fallthru
          _
      $region12: #{tpu_custom_call.1} parent=5 // pred_fallthru
        _
      %p240 = scmp.lt.s32.totalorder %s18, 2
      // Predicated region
      $region21: #{tpu_custom_call.1} parent=5 // pred_check
        %p241 = pneg %p240
      $region22: #{tpu_custom_call.1} parent=5 // pred_check_branch
        %243 = sbr.rel (%p241) target = $region24
      $region23: #{tpu_custom_call.1} parent=5 // pred_region
        // Predicated region
        $region25: #{tpu_custom_call.1} parent=23 // pred_check
          %p244 = pneg %p59
        $region26: #{tpu_custom_call.1} parent=23 // pred_check_branch
          %246 = sbr.rel (%p244) target = $region28
        $region27: #{tpu_custom_call.1} parent=23 // pred_region
          %s247 = sand.u32 %s18, 1
          %s248 = scalar_lea.sflag [#allocation7], %s247
          %s249 = sand.u32 %s49, 1
          %s250 = smul.addr %s249, 64
          %s251 = scalar_lea.vmem [#allocation6], %s250
          %s253 = ssub.s32 1024, 1024
          %254 = vsyncadd %s248, %s253
          %s255 = smul.addr %s18, 64
          %s256 = scalar_lea.hbm %s1, %s255
          %s257 = sshll.u32 %s251, 4
          %s258 = int_to_ptr.vmem [resolvable:$true] %s257
          %263 = dma.hbm_to_vmem [thread:$0]  %s256, 1024, %s258, %s248, 128, 64, 4
        $region28: #{tpu_custom_call.1} parent=23 // pred_fallthru
          _
        // Predicated region
        $region29: #{tpu_custom_call.1} parent=23 // pred_check
          %p264 = pneg %p85
        $region30: #{tpu_custom_call.1} parent=23 // pred_check_branch
          %266 = sbr.rel (%p264) target = $region32
        $region31: #{tpu_custom_call.1} parent=23 // pred_region
          %p267 = scmp.lt.s32.totalorder %s18, 1
          %s268 = scalar_select %p267, %s18, 1
          %s269 = scalar_lea.vmem %s2, %s268
        $region32: #{tpu_custom_call.1} parent=23 // pred_fallthru
          _
        // Predicated region
        $region33: #{tpu_custom_call.1} parent=23 // pred_check
          %p270 = pneg %p111
        $region34: #{tpu_custom_call.1} parent=23 // pred_check_branch
          %272 = sbr.rel (%p270) target = $region36
        $region35: #{tpu_custom_call.1} parent=23 // pred_region
          %p273 = scmp.lt.s32.totalorder %s18, 1
          %s274 = scalar_select %p273, %s18, 1
          %s275 = scalar_lea.vmem %s3, %s274
        $region36: #{tpu_custom_call.1} parent=23 // pred_fallthru
          _
        // Predicated region
        $region37: #{tpu_custom_call.1} parent=23 // pred_check
          %p276 = pneg %p137
        $region38: #{tpu_custom_call.1} parent=23 // pred_check_branch
          %278 = sbr.rel (%p276) target = $region40
        $region39: #{tpu_custom_call.1} parent=23 // pred_region
          %p279 = scmp.lt.s32.totalorder %s18, 1
          %s280 = scalar_select %p279, %s18, 1
          %s281 = scalar_lea.vmem %s4, %s280
        $region40: #{tpu_custom_call.1} parent=23 // pred_fallthru
          _
        // Predicated region
        $region41: #{tpu_custom_call.1} parent=23 // pred_check
          %p282 = pneg %p163
        $region42: #{tpu_custom_call.1} parent=23 // pred_check_branch
          %284 = sbr.rel (%p282) target = $region44
        $region43: #{tpu_custom_call.1} parent=23 // pred_region
          %s285 = sand.u32 %s18, 1
          %s286 = scalar_lea.sflag [#allocation7], %s285
          %s287 = sand.u32 %s153, 1
          %s288 = smul.addr %s287, 64
          %s289 = scalar_lea.vmem [#allocation8], %s288
          %s290 = smul.u32 16, %s18
          %s292 = ssub.s32 1024, 1024
          %293 = vsyncadd %s286, %s292
          %s294 = smul.addr %s290, 64
          %s295 = scalar_lea.hbm %s5, %s294
          %s296 = sshll.u32 %s289, 4
          %s297 = int_to_ptr.vmem [resolvable:$true] %s296
          %302 = dma.hbm_to_vmem [thread:$0]  %s295, 1024, %s297, %s286, 64, 64, 4
        $region44: #{tpu_custom_call.1} parent=23 // pred_fallthru
          _
      $region24: #{tpu_custom_call.1} parent=5 // pred_fallthru
        _
      %p303 = scmp.le.s32.totalorder 1, %s18
      %p304 = scmp.lt.s32.totalorder %s18, 3
      %p305 = pnand %p303, %p304
      %p306 = pneg %p305
      // Predicated region
      $region45: #{tpu_custom_call.1} parent=5 // pred_check
        _
      $region46: #{tpu_custom_call.1} parent=5 // pred_check_branch
        %308 = sbr.rel (%p305) target = $region48
      $region47: #{tpu_custom_call.1} parent=5 // pred_region
        %s309 = ssub.s32 %s18, 1
        // Predicated region
        $region49: #{tpu_custom_call.1} parent=47 // pred_check
          %p310 = pneg %p39
        $region50: #{tpu_custom_call.1} parent=47 // pred_check_branch
          %312 = sbr.rel (%p310) target = $region52
        $region51: #{tpu_custom_call.1} parent=47 // pred_region
          %313 = dma.done [#allocation4], 128
        $region52: #{tpu_custom_call.1} parent=47 // pred_fallthru
          _
        %s314 = sand.u32 %s23, 1
        %s315 = scalar_lea.sflag [#allocation7], %s314
        %s316 = sand.u32 %s52, 1
        %s317 = smul.addr %s316, 64
        %s318 = scalar_lea.vmem [#allocation6], %s317
        // Predicated region
        $region53: #{tpu_custom_call.1} parent=47 // pred_check
          %p319 = pneg %p65
        $region54: #{tpu_custom_call.1} parent=47 // pred_check_branch
          %321 = sbr.rel (%p319) target = $region56
        $region55: #{tpu_custom_call.1} parent=47 // pred_region
          %322 = dma.done %s315, 1024
        $region56: #{tpu_custom_call.1} parent=47 // pred_fallthru
          _
        %s323 = sand.u32 %s23, 1
        %s324 = scalar_lea.sflag [#allocation7], %s323
        %s325 = sand.u32 %s156, 1
        %s326 = smul.addr %s325, 64
        %s327 = scalar_lea.vmem [#allocation8], %s326
        // Predicated region
        $region57: #{tpu_custom_call.1} parent=47 // pred_check
          %p328 = pneg %p169
        $region58: #{tpu_custom_call.1} parent=47 // pred_check_branch
          %330 = sbr.rel (%p328) target = $region60
        $region59: #{tpu_custom_call.1} parent=47 // pred_region
          %331 = dma.done %s324, 1024
        $region60: #{tpu_custom_call.1} parent=47 // pred_fallthru
          _
        %p332 = pneg %p39
        %p333 = pneg %p36
        %s334 = sand.u32 %s23, 1
        %s335 = scalar_lea.sflag [#allocation7], %s334
        %s336 = sand.u32 %s52, 1
        %s337 = smul.addr %s336, 64
        %s338 = scalar_lea.vmem [#allocation6], %s337
        %p339 = pneg %p65
        %p340 = pneg %p62
        %p341 = scmp.lt.s32.totalorder %s23, 1
        %s342 = scalar_select %p341, %s23, 1
        %s343 = scalar_lea.vmem %s2, %s342
        %p344 = pneg %p91
        %p345 = pneg %p88
        %p346 = scmp.lt.s32.totalorder %s23, 1
        %s347 = scalar_select %p346, %s23, 1
        %s348 = scalar_lea.vmem %s3, %s347
        %p349 = pneg %p117
        %p350 = pneg %p114
        %p351 = scmp.lt.s32.totalorder %s23, 1
        %s352 = scalar_select %p351, %s23, 1
        %s353 = scalar_lea.vmem %s4, %s352
        %p354 = pneg %p143
        %p355 = pneg %p140
        %s356 = sand.u32 %s23, 1
        %s357 = scalar_lea.sflag [#allocation7], %s356
        %s358 = sand.u32 %s156, 1
        %s359 = smul.addr %s358, 64
        %s360 = scalar_lea.vmem [#allocation8], %s359
        %p361 = pneg %p169
        %p362 = pneg %p166
        %p363 = pneg %p190
        %p364 = pneg %p187
        %p365 = pneg %p211
        %p366 = pneg %p208
        %p367 = scmp.lt.s32.totalorder %s23, 1
        %s368 = scalar_select %p367, %s23, 1
        %s369 = scalar_lea.vmem %s2, %s368
        %p370 = scmp.lt.s32.totalorder %s23, 1
        %s371 = scalar_select %p370, %s23, 1
        %s372 = scalar_lea.vmem %s3, %s371
        %p373 = scmp.lt.s32.totalorder %s23, 1
        %s374 = scalar_select %p373, %s23, 1
        %s375 = scalar_lea.vmem %s4, %s374
        %s376 = smul.u32 16, %s23
        %p378 = scmp.eq.s32.totalorder %s23, 0
        // Predicated region
        $region61: #{tpu_custom_call.1} parent=47 // pred_check
          %p379 = pneg %p378
        $region62: #{tpu_custom_call.1} parent=47 // pred_check_branch
          %381 = sbr.rel (%p379) target = $region64
        $region63: #{tpu_custom_call.1} parent=47 // pred_region
          %382 = vst [vmem:[#allocation2] sm:$0xff] 0.0
        $region64: #{tpu_custom_call.1} parent=47 // pred_fallthru
          _
        %v383 = vld [vmem:[#allocation3] sm:$0xff]
        %v384 = vpack.c.bf16 %v383, %v383
        %v385 = vld [vmem:[%s318] sm:$0xf]
        %v386 = vld [vmem:[%s318 + $0x4] sm:$0xf]
        %v387 = vld [vmem:[%s318 + $0x8] sm:$0xf]
        %v388 = vld [vmem:[%s318 + $0xc] sm:$0xf]
        %v389 = vld [vmem:[%s318 + $0x10] sm:$0xf]
        %v390 = vld [vmem:[%s318 + $0x14] sm:$0xf]
        %v391 = vld [vmem:[%s318 + $0x18] sm:$0xf]
        %v392 = vld [vmem:[%s318 + $0x1c] sm:$0xf]
        %v393 = vld [vmem:[%s318 + $0x20] sm:$0xf]
        %v394 = vld [vmem:[%s318 + $0x24] sm:$0xf]
        %v395 = vld [vmem:[%s318 + $0x28] sm:$0xf]
        %v396 = vld [vmem:[%s318 + $0x2c] sm:$0xf]
        %v397 = vld [vmem:[%s318 + $0x30] sm:$0xf]
        %v398 = vld [vmem:[%s318 + $0x34] sm:$0xf]
        %v399 = vld [vmem:[%s318 + $0x38] sm:$0xf]
        %v400 = vld [vmem:[%s318 + $0x3c] sm:$0xf]
        %v401 = vld [vmem:[%s369] sm:$0x1]
        %v403 = vlaneseq
        %v404 = vshrl.u32 %v403, 7
        %v405 = vsub.s32 0, %v404
        %v406 = vrot.slane %v401, %v405
        %v424 = vunpack.c.l.b16 %v385
        %v425 = vunpack.c.l.b16 %v386
        %v426 = vunpack.c.l.b16 %v387
        %v427 = vunpack.c.l.b16 %v388
        %v428 = vunpack.c.l.b16 %v389
        %v429 = vunpack.c.l.b16 %v390
        %v430 = vunpack.c.l.b16 %v391
        %v431 = vunpack.c.l.b16 %v392
        %v432 = vunpack.c.l.b16 %v393
        %v433 = vunpack.c.l.b16 %v394
        %v434 = vunpack.c.l.b16 %v395
        %v435 = vunpack.c.l.b16 %v396
        %v436 = vunpack.c.l.b16 %v397
        %v437 = vunpack.c.l.b16 %v398
        %v438 = vunpack.c.l.b16 %v399
        %v439 = vunpack.c.l.b16 %v400
        %v440 = vpack.c.b16 %v425, %v424
        %v441 = vpack.c.b16 %v427, %v426
        %v442 = vpack.c.b16 %v429, %v428
        %v443 = vpack.c.b16 %v431, %v430
        %v444 = vpack.c.b16 %v433, %v432
        %v445 = vpack.c.b16 %v435, %v434
        %v446 = vpack.c.b16 %v437, %v436
        %v447 = vpack.c.b16 %v439, %v438
        %456 = vmatprep.subr.bf16.mxu0 0
        %457 = vmatpush1.bf16.msra.mxu0 %v440
        %458 = vmatprep.subr.bf16.mxu0 0
        %459 = vmatpush1.bf16.msra.mxu0 %v441
        %460 = vmatprep.subr.bf16.mxu0 0
        %461 = vmatpush1.bf16.msra.mxu0 %v442
        %462 = vmatprep.subr.bf16.mxu0 0
        %463 = vmatpush1.bf16.msra.mxu0 %v443
        %464 = vmatprep.subr.bf16.mxu0 0
        %465 = vmatpush1.bf16.msra.mxu0 %v444
        %466 = vmatprep.subr.bf16.mxu0 0
        %467 = vmatpush1.bf16.msra.mxu0 %v445
        %468 = vmatprep.subr.bf16.mxu0 0
        %469 = vmatpush1.bf16.msra.mxu0 %v446
        %470 = vmatprep.subr.bf16.mxu0 0
        %471 = vmatpush1.bf16.msra.mxu0 %v447
        %472 = vmatprep.subr.bf16.mxu0 0
        %473 = vmatpush1.bf16.msra.mxu0 0
        %474 = vmatprep.subr.bf16.mxu0 0
        %475 = vmatpush1.bf16.msra.mxu0 0
        %476 = vmatprep.subr.bf16.mxu0 0
        %477 = vmatpush1.bf16.msra.mxu0 0
        %478 = vmatprep.subr.bf16.mxu0 0
        %479 = vmatpush1.bf16.msra.mxu0 0
        %480 = vmatprep.subr.bf16.mxu0 0
        %481 = vmatpush1.bf16.msra.mxu0 0
        %482 = vmatprep.subr.bf16.mxu0 0
        %483 = vmatpush1.bf16.msra.mxu0 0
        %484 = vmatprep.subr.bf16.mxu0 0
        %485 = vmatpush1.bf16.msra.mxu0 0
        %486 = vmatprep.subr.bf16.mxu0 0
        %487 = vmatpush1.bf16.msra.mxu0 0
        %488 = vmatprep.mubr.bf16.mxu0 0
        %489 = vmatmul.mubr.bf16.gmra.mrb[0].mxu0 %v384
        %v490 = vpop.f32.mrb[0].mxu0
        %v491 = vadd.f32 %v406, %v490
        %v492 = vpop.f32.mrb[0].mxu0
        %v493 = vpop.f32.mrb[0].mxu0
        %v494 = vpop.f32.mrb[0].mxu0
        %495 = vdwg.mxu0
        %v496 = vrot.slane %v491, 4
        %v497 = vadd.f32 %v491, %v496
        %v498 = vrot.slane %v497, 2
        %v499 = vadd.f32 %v497, %v498
        %v500 = vrot.slane %v499, 1
        %v501 = vadd.f32 %v499, %v500
        %v502 = vmul.f32 %v501, 0.125
        %v503 = vmul.f32 %v491, %v491
        %v504 = vrot.slane %v503, 4
        %v505 = vadd.f32 %v503, %v504
        %v506 = vrot.slane %v505, 2
        %v507 = vadd.f32 %v505, %v506
        %v508 = vrot.slane %v507, 1
        %v509 = vadd.f32 %v507, %v508
        %v510 = vmul.f32 %v509, 0.125
        %v511 = vmul.f32 %v502, %v502
        %v512 = vsub.f32 %v510, %v511
        %v513 = vmax.f32 %v512, 0.0
        %v514 = vsub.f32 %v491, %v502
        %v515 = vadd.f32 %v513, 1e-05
        %v516 = vrsqrt.pop %v515
        %v517 = vmul.f32 %v514, %v516
        %v518 = vld [vmem:[%s372] sm:$0x1]
        %v520 = vlaneseq
        %v521 = vshrl.u32 %v520, 7
        %v522 = vsub.s32 0, %v521
        %v523 = vrot.slane %v518, %v522
        %v525 = vmul.f32 %v517, %v523
        %v526 = vld [vmem:[%s375] sm:$0x1]
        %v528 = vlaneseq
        %v529 = vshrl.u32 %v528, 7
        %v530 = vsub.s32 0, %v529
        %v531 = vrot.slane %v526, %v530
        %v533 = vadd.f32 %v525, %v531
        %v534 = vmax.f32 %v533, 0.0
        %v535 = vld [vmem:[#allocation2] sm:$0xff]
        %v536 = vpack.c.bf16 %v534, %v534
        %v537 = vld [vmem:[%s327] sm:$0xf]
        %v538 = vld [vmem:[%s327 + $0x4] sm:$0xf]
        %v539 = vld [vmem:[%s327 + $0x8] sm:$0xf]
        %v540 = vld [vmem:[%s327 + $0xc] sm:$0xf]
        %v541 = vld [vmem:[%s327 + $0x10] sm:$0xf]
        %v542 = vld [vmem:[%s327 + $0x14] sm:$0xf]
        %v543 = vld [vmem:[%s327 + $0x18] sm:$0xf]
        %v544 = vld [vmem:[%s327 + $0x1c] sm:$0xf]
        %v545 = vld [vmem:[%s327 + $0x20] sm:$0xf]
        %v546 = vld [vmem:[%s327 + $0x24] sm:$0xf]
        %v547 = vld [vmem:[%s327 + $0x28] sm:$0xf]
        %v548 = vld [vmem:[%s327 + $0x2c] sm:$0xf]
        %v549 = vld [vmem:[%s327 + $0x30] sm:$0xf]
        %v550 = vld [vmem:[%s327 + $0x34] sm:$0xf]
        %v551 = vld [vmem:[%s327 + $0x38] sm:$0xf]
        %v552 = vld [vmem:[%s327 + $0x3c] sm:$0xf]
        %v569 = vunpack.c.l.b16 %v537
        %v570 = vunpack.c.l.b16 %v538
        %v571 = vunpack.c.l.b16 %v539
        %v572 = vunpack.c.l.b16 %v540
        %v573 = vunpack.c.l.b16 %v541
        %v574 = vunpack.c.l.b16 %v542
        %v575 = vunpack.c.l.b16 %v543
        %v576 = vunpack.c.l.b16 %v544
        %v577 = vunpack.c.l.b16 %v545
        %v578 = vunpack.c.l.b16 %v546
        %v579 = vunpack.c.l.b16 %v547
        %v580 = vunpack.c.l.b16 %v548
        %v581 = vunpack.c.l.b16 %v549
        %v582 = vunpack.c.l.b16 %v550
        %v583 = vunpack.c.l.b16 %v551
        %v584 = vunpack.c.l.b16 %v552
        %v585 = vpack.c.b16 %v570, %v569
        %v586 = vpack.c.b16 %v572, %v571
        %v587 = vpack.c.b16 %v574, %v573
        %v588 = vpack.c.b16 %v576, %v575
        %v589 = vpack.c.b16 %v578, %v577
        %v590 = vpack.c.b16 %v580, %v579
        %v591 = vpack.c.b16 %v582, %v581
        %v592 = vpack.c.b16 %v584, %v583
        %601 = vmatprep.subr.bf16.mxu0 0
        %602 = vmatpush1.bf16.msra.mxu0 %v585
        %603 = vmatprep.subr.bf16.mxu0 0
        %604 = vmatpush1.bf16.msra.mxu0 %v586
        %605 = vmatprep.subr.bf16.mxu0 0
        %606 = vmatpush1.bf16.msra.mxu0 %v587
        %607 = vmatprep.subr.bf16.mxu0 0
        %608 = vmatpush1.bf16.msra.mxu0 %v588
        %609 = vmatprep.subr.bf16.mxu0 0
        %610 = vmatpush1.bf16.msra.mxu0 %v589
        %611 = vmatprep.subr.bf16.mxu0 0
        %612 = vmatpush1.bf16.msra.mxu0 %v590
        %613 = vmatprep.subr.bf16.mxu0 0
        %614 = vmatpush1.bf16.msra.mxu0 %v591
        %615 = vmatprep.subr.bf16.mxu0 0
        %616 = vmatpush1.bf16.msra.mxu0 %v592
        %617 = vmatprep.subr.bf16.mxu0 0
        %618 = vmatpush1.bf16.msra.mxu0 0
        %619 = vmatprep.subr.bf16.mxu0 0
        %620 = vmatpush1.bf16.msra.mxu0 0
        %621 = vmatprep.subr.bf16.mxu0 0
        %622 = vmatpush1.bf16.msra.mxu0 0
        %623 = vmatprep.subr.bf16.mxu0 0
        %624 = vmatpush1.bf16.msra.mxu0 0
        %625 = vmatprep.subr.bf16.mxu0 0
        %626 = vmatpush1.bf16.msra.mxu0 0
        %627 = vmatprep.subr.bf16.mxu0 0
        %628 = vmatpush1.bf16.msra.mxu0 0
        %629 = vmatprep.subr.bf16.mxu0 0
        %630 = vmatpush1.bf16.msra.mxu0 0
        %631 = vmatprep.subr.bf16.mxu0 0
        %632 = vmatpush1.bf16.msra.mxu0 0
        %633 = vmatprep.mubr.bf16.mxu0 0
        %634 = vmatmul.mubr.bf16.gmra.mrb[0].mxu0 %v536
        %v635 = vpop.f32.mrb[0].mxu0
        %v636 = vadd.f32 0.0, %v635
        %v637 = vpop.f32.mrb[0].mxu0
        %v638 = vpop.f32.mrb[0].mxu0
        %v639 = vpop.f32.mrb[0].mxu0
        %640 = vdwg.mxu0
        %v641 = vadd.f32 %v535, %v636
        %642 = vst [vmem:[#allocation2] sm:$0xff] %v641
        %p643 = scmp.eq.s32.totalorder %s23, 1
        // Predicated region
        $region65: #{tpu_custom_call.1} parent=47 // pred_check
          %p644 = pneg %p643
        $region66: #{tpu_custom_call.1} parent=47 // pred_check_branch
          %646 = sbr.rel (%p644) target = $region68
        $region67: #{tpu_custom_call.1} parent=47 // pred_region
          %v647 = vld [vmem:[#allocation2] sm:$0xff]
          %v648 = vld [vmem:[%s6] sm:$0x1]
          %v650 = vlaneseq
          %v651 = vshrl.u32 %v650, 7
          %v652 = vsub.s32 0, %v651
          %v653 = vrot.slane %v648, %v652
          %v655 = vadd.f32 %v647, %v653
          %v656 = vld [vmem:[#allocation3] sm:$0xff]
          %v657 = vadd.f32 %v655, %v656
          %658 = vst [vmem:[#allocation9] sm:$0xff] %v657
        $region68: #{tpu_custom_call.1} parent=47 // pred_fallthru
          _
        // Predicated region
        $region69: #{tpu_custom_call.1} parent=47 // pred_check
          %p659 = pneg %p208
        $region70: #{tpu_custom_call.1} parent=47 // pred_check_branch
          %661 = sbr.rel (%p659) target = $region72
        $region71: #{tpu_custom_call.1} parent=47 // pred_region
          %s663 = ssub.s32 128, 128
          %664 = vsyncadd [#allocation5], %s663
          %s666 = sshll.u32 [#allocation9], 4
          %s667 = int_to_ptr.vmem [resolvable:$true] %s666
          %669 = dma.vmem_to_hbm [thread:$0]  %s667, 128, %s7, [#allocation5]
        $region72: #{tpu_custom_call.1} parent=47 // pred_fallthru
          _
        // Predicated region
        $region73: #{tpu_custom_call.1} parent=47 // pred_check
          %p670 = pneg %p208
        $region74: #{tpu_custom_call.1} parent=47 // pred_check_branch
          %672 = sbr.rel (%p670) target = $region76
        $region75: #{tpu_custom_call.1} parent=47 // pred_region
          %673 = dma.done [#allocation5], 128
        $region76: #{tpu_custom_call.1} parent=47 // pred_fallthru
          _
      $region48: #{tpu_custom_call.1} parent=5 // pred_fallthru
        _
      %p674 = scmp.le.s32.totalorder 2, %s18
      // Predicated region
      $region77: #{tpu_custom_call.1} parent=5 // pred_check
        %p675 = pneg %p674
      $region78: #{tpu_custom_call.1} parent=5 // pred_check_branch
        %677 = sbr.rel (%p675) target = $region80
      $region79: #{tpu_custom_call.1} parent=5 // pred_region
        %s678 = ssub.s32 %s18, 2
      $region80: #{tpu_custom_call.1} parent=5 // pred_fallthru
        _
    $region6: #{tpu_custom_call.1} parent=1 // loop_footer
      %s22 = sadd.s32 1, %s18
    $region7: #{tpu_custom_call.1} parent=1 // loop_footer_branch
      %17 = sbr.rel target = $region3
    $region8: #{tpu_custom_call.1} parent=1 // loop_exit
      _
    %679 = vsyncpa [#allocation4], 1
    %s680 = scalar_lea.sflag [#allocation4], 1
    %681 = vsyncpa %s680, 1
    %682 = vsyncpa [#allocation7], 1
    %s683 = scalar_lea.sflag [#allocation7], 1
    %684 = vsyncpa %s683, 1
    %685 = vsyncpa [#allocation5], 1
    %s686 = scalar_lea.sflag [#allocation5], 1
    %687 = vsyncpa %s686, 1

</llo_original>
